<compile_context>
chip_gen: v7x
topology: tpu7x:2x2x1
jax: 0.10.0
libtpu: 0.0.40
codegen_flags: <defaults>
</compile_context>

<pallas_src>
import jax
import jax.numpy as jnp
from jax.experimental import pallas as pl
from jax.experimental.pallas import tpu as pltpu

_LANES = 128
_SUBLANES = 8
# ~2 MiB per block: >=85% of HBM roofline for f32 elementwise, and
# input+output double-buffering (4 live buffers ~= 8 MiB) fits every
# generation's scoped-VMEM default without raising vmem_limit_bytes.
_TARGET_BLOCK_BYTES = 2 * 1024 * 1024


def _neg_scale_kernel(alpha_ref, g_ref, o_ref):
    # Backward of GradientReversal: grad_in = -alpha * grad_out.
    # alpha stays in f32 (SMEM); only the final product is cast to out dtype.
    alpha = alpha_ref[0]
    g = g_ref[...].astype(jnp.float32)
    o_ref[...] = (g * (-alpha)).astype(o_ref.dtype)


def _pick_layout(n, itemsize):
    """Lane-dense (rows, cols, tile_rows) factorization of n, or None."""
    for cols in (1024, 512, 256, 128):
        if n % cols == 0:
            rows = n // cols
            tile_rows = max(
                _SUBLANES,
                (_TARGET_BLOCK_BYTES // (cols * itemsize)) // _SUBLANES * _SUBLANES,
            )
            if rows <= tile_rows:
                tile_rows = rows  # single block == full array dims (always legal)
            return rows, cols, tile_rows
    return None


def _run_neg_scale(alpha, g):
    """grad_in = -alpha * grad_out as one memory-bound Pallas pass."""
    n = g.size
    alpha_f32 = jnp.asarray(alpha, dtype=jnp.float32).reshape((1,))
    layout = _pick_layout(n, jnp.dtype(g.dtype).itemsize)
    if layout is None:
        # Ragged / tiny shapes: let XLA fuse a plain multiply instead of
        # paying pad + kernel + slice HBM round-trips.
        return ((-alpha_f32[0]) * g.astype(jnp.float32)).astype(g.dtype)

    rows, cols, tile_rows = layout
    g2d = g.reshape(rows, cols)  # free metadata reshape, no pad/slice
    grid = (pl.cdiv(rows, tile_rows),)
    y2d = pl.pallas_call(
        _neg_scale_kernel,
        out_shape=jax.ShapeDtypeStruct(g2d.shape, g2d.dtype),
        grid_spec=pltpu.PrefetchScalarGridSpec(
            num_scalar_prefetch=0,
            grid=grid,
            in_specs=[
                pl.BlockSpec(memory_space=pltpu.SMEM),          # alpha (f32)
                pl.BlockSpec((tile_rows, cols), lambda i: (i, 0)),
            ],
            out_specs=pl.BlockSpec((tile_rows, cols), lambda i: (i, 0)),
        ),
        # In-place scale: donate the gradient buffer, save an HBM allocation.
        input_output_aliases={1: 0},
        compiler_params=pltpu.CompilerParams(
            dimension_semantics=("parallel",)),
    )(alpha_f32, g2d)
    return y2d.reshape(g.shape)


@jax.custom_vjp
def revgrad(x, alpha):
    # Forward is identity: no kernel, no extra HBM traffic.
    return x


def _revgrad_fwd(x, alpha):
    return x, alpha


def _revgrad_bwd(alpha, grad_out):
    grad_in = _run_neg_scale(alpha, grad_out)
    # alpha gets a zero cotangent (matches the PyTorch `return grad_input, None`
    # while satisfying custom_vjp's pytree-matching requirement).
    return (grad_in, jnp.zeros_like(alpha))


revgrad.defvjp(_revgrad_fwd, _revgrad_bwd)


class GradientReversalLayer:
    """JAX/Pallas equivalent of the PyTorch GradientReversal_Layer."""

    def __init__(self, alpha):
        self.alpha = jnp.asarray(alpha, dtype=jnp.float32)

    def __call__(self, x):
        return revgrad(x, self.alpha)


if __name__ == "__main__":
    key = jax.random.PRNGKey(0)
    # NCHW input consistent with the module's conv-feature usage.
    x = jax.random.normal(key, (2, 4, 16, 16), dtype=jnp.float32)

    layer = GradientReversalLayer(alpha=0.5)

    # Forward: identity, no kernel.
    y = jax.block_until_ready(layer(x))
    assert y.shape == x.shape and y.dtype == x.dtype
    assert bool(jnp.allclose(y, x)), "forward must be identity"

    # Backward: runs the Pallas -alpha*grad kernel (2048 elems -> (2, 1024) slab).
    g = jax.block_until_ready(jax.grad(lambda inp: jnp.sum(layer(inp)))(x))
    assert g.shape == x.shape and g.dtype == x.dtype
    assert bool(jnp.allclose(g, -0.5 * jnp.ones_like(x))), "grad must be -alpha"

    print("KERNEL_OK")
</pallas_src>

<mosaic_0001>
module attributes {stable_mosaic.version = 11 : i64} {
  func.func @_neg_scale_kernel(%arg0: i32, %arg1: memref<1xf32, #tpu.memory_space<smem>>, %arg2: memref<2x1024xf32, #tpu.memory_space<vmem>>, %arg3: memref<2x1024xf32, #tpu.memory_space<vmem>>) attributes {dimension_semantics = [#tpu.dimension_semantics<parallel>], iteration_bounds = array<i64: 1>, scalar_prefetch = 0 : i64, scratch_operands = 0 : i64, tpu.core_type = #tpu.core_type<tc>, window_params = [{transform_indices = @transform_0, window_bounds = array<i64: 1>}, {transform_indices = @transform_1, window_bounds = array<i64: 2, 1024>}, {transform_indices = @transform_2, window_bounds = array<i64: 2, 1024>}]} {
    %c0 = arith.constant 0 : index
    %0 = memref.load %arg1[%c0] : memref<1xf32, #tpu.memory_space<smem>>
    %c0_0 = arith.constant 0 : index
    %c0_1 = arith.constant 0 : index
    %1 = vector.load %arg2[%c0_0, %c0_1] : memref<2x1024xf32, #tpu.memory_space<vmem>>, vector<2x1024xf32>
    %cst = arith.constant 0.000000e+00 : f32
    %2 = arith.subf %cst, %0 : f32
    %3 = vector.broadcast %2 : f32 to vector<2x1024xf32>
    %4 = arith.mulf %1, %3 : vector<2x1024xf32>
    %c0_2 = arith.constant 0 : index
    %c0_3 = arith.constant 0 : index
    %5 = vector.load %arg3[%c0_2, %c0_3] : memref<2x1024xf32, #tpu.memory_space<vmem>>, vector<2x1024xf32>
    tpu.vector_store %arg3[%c0_2, %c0_3], %4 {strides = array<i32>} : memref<2x1024xf32, #tpu.memory_space<vmem>>, vector<2x1024xf32>,
    return
  }
  func.func @transform_0(%arg0: i32) -> i32 {
    %c0_i32 = arith.constant 0 : i32
    %c0_i32_0 = arith.constant 0 : i32
    return %c0_i32 : i32
  }
  func.func @transform_1(%arg0: i32) -> (i32, i32) {
    %c0_i32 = arith.constant 0 : i32
    %c0_i32_0 = arith.constant 0 : i32
    return %arg0, %c0_i32 : i32, i32
  }
  func.func @transform_2(%arg0: i32) -> (i32, i32) {
    %c0_i32 = arith.constant 0 : i32
    %c0_i32_0 = arith.constant 0 : i32
    return %arg0, %c0_i32 : i32, i32
  }
}

</mosaic_0001>

<llo_original>
// kernel: tpu_custom_call.1
$region0: #{tpu_custom_call.1}
  #allocation0 [shape = 'u32[]', space=smem, size = 0x4, offset = 0x4, fixed_abs, tag = 'smem constant byte address 0x4 - core index']
  #allocation1 [shape = 'u32[144,128]{1,0:T(1,128)}', space=vmem, size = 0x12000, scoped, tag = 'internal scratch']
  #allocation2 [shape = 'f32[1]{0:T(128)S(6)}', space=smem, size = 0x200, scoped, tag = 'scoped memory for tpu_custom_call.1']
  %s0 = inlined_call_operand.<no memory space> [shape: f32[1], index: 0, kind: input, shape index: {}]
  %s1 = inlined_call_operand.hbm [shape: f32[2,1024], index: 1, kind: input, shape index: {}, may-alias: {1,2}]
  %s2 = inlined_call_operand.hbm [shape: f32[2,1024], index: 2, kind: output, shape index: {}, may-alias: {1,2}]
  %s3 = sld [smem:[#allocation0]]
  $region22: #{tpu_custom_call.1} parent=0
    _
  %s5 = ssub.s32 1, %s3
  %s6 = scalar_select 0, %s5, %s3
  %7 = sst [smem:[#allocation2]] %s0
  $region1: #{tpu_custom_call.1} parent=0
    #allocation3 [shape = 'u8[8192]{0}', space=vmem, size = 0x2000, scoped, tag = 'input window, operand 1, single buffered']
    #allocation4 [shape = 's32[1]{0}', space=sflag, size = 0x4, scoped, tag = 'scoped memory for tpu_custom_call.1']
    #allocation5 [shape = 's32[1]{0}', space=sflag, size = 0x4, scoped, tag = 'scoped memory for tpu_custom_call.1']
    #allocation6 [shape = 'u8[8192]{0}', space=vmem, size = 0x2000, scoped, tag = 'output window, operand 0, single buffered']
    %8 = vsyncpa [#allocation4], 0
    %9 = vsyncpa [#allocation5], 0
    // Predicated region
    $region2: #{tpu_custom_call.1} parent=1 // pred_check
      _
    $region3: #{tpu_custom_call.1} parent=1 // pred_check_branch
      %11 = sbr.rel (0) target = $region5
    $region4: #{tpu_custom_call.1} parent=1 // pred_region
      _
    $region5: #{tpu_custom_call.1} parent=1 // pred_fallthru
      _
    // Predicated region
    $region6: #{tpu_custom_call.1} parent=1 // pred_check
      _
    $region7: #{tpu_custom_call.1} parent=1 // pred_check_branch
      %13 = sbr.rel (0) target = $region9
    $region8: #{tpu_custom_call.1} parent=1 // pred_region
      %s15 = ssub.s32 256, 256
      %16 = vsyncadd [#allocation4], %s15
      %s18 = sshll.u32 [#allocation3], 4
      %s19 = int_to_ptr.vmem [resolvable:$true] %s18
      %21 = dma.hbm_to_vmem [thread:$0]  %s1, 256, %s19, [#allocation4]
    $region9: #{tpu_custom_call.1} parent=1 // pred_fallthru
      _
    // Predicated region
    $region10: #{tpu_custom_call.1} parent=1 // pred_check
      _
    $region11: #{tpu_custom_call.1} parent=1 // pred_check_branch
      %23 = sbr.rel (0) target = $region13
    $region12: #{tpu_custom_call.1} parent=1 // pred_region
      %24 = dma.done [#allocation4], 256
    $region13: #{tpu_custom_call.1} parent=1 // pred_fallthru
      _
    %s25 = sld [smem:[#allocation2]]
    %v26 = vld [vmem:[#allocation3] sm:$0xff]
    %v27 = vld [vmem:[#allocation3 + $0x8] sm:$0xff]
    %s28 = ssub.f32 0.0, %s25
    %v29 = vstv %s28
    %v30 = vmul.f32 %v26, %v29
    %v31 = vmul.f32 %v27, %v29
    %32 = vst [vmem:[#allocation6] sm:$0xff] %v30
    %33 = vst [vmem:[#allocation6 + $0x8] sm:$0xff] %v31
    // Predicated region
    $region14: #{tpu_custom_call.1} parent=1 // pred_check
      _
    $region15: #{tpu_custom_call.1} parent=1 // pred_check_branch
      %35 = sbr.rel (0) target = $region17
    $region16: #{tpu_custom_call.1} parent=1 // pred_region
      %s37 = ssub.s32 256, 256
      %38 = vsyncadd [#allocation5], %s37
      %s40 = sshll.u32 [#allocation6], 4
      %s41 = int_to_ptr.vmem [resolvable:$true] %s40
      %43 = dma.vmem_to_hbm [thread:$0]  %s41, 256, %s2, [#allocation5]
    $region17: #{tpu_custom_call.1} parent=1 // pred_fallthru
      _
    // Predicated region
    $region18: #{tpu_custom_call.1} parent=1 // pred_check
      _
    $region19: #{tpu_custom_call.1} parent=1 // pred_check_branch
      %45 = sbr.rel (0) target = $region21
    $region20: #{tpu_custom_call.1} parent=1 // pred_region
      %46 = dma.done [#allocation5], 256
    $region21: #{tpu_custom_call.1} parent=1 // pred_fallthru
      _
    %47 = vsyncpa [#allocation4], 1
    %48 = vsyncpa [#allocation5], 1

</llo_original>
